<compile_context>
chip_gen: v5e
topology: v5e:2x2
jax: 0.10.0
libtpu: 0.0.40
codegen_flags: <defaults>
</compile_context>

<pallas_src>
import functools

import jax
import jax.numpy as jnp
from jax.experimental import pallas as pl
from jax.experimental.pallas import tpu as pltpu


def _round_up(x, m):
    return (x + m - 1) // m * m


# --------------------------------------------------------------------------- #
# Kernel 1: Bahdanau attention + single LSTM step (tiny, one grid point)
# --------------------------------------------------------------------------- #
def _attn_lstm_kernel(B, S, A, HH, E2,
                      emb_ref, h_ref, c_ref, enc_ref,
                      W_ref, whh_U_ref, v_ref,
                      wih_e_ref, wih_c_ref, b_ref,
                      hout_ref, cout_ref, attn_ref):
    h = h_ref[...]                                              # (B, HH)
    c = c_ref[...]                                              # (B, HH)
    enc = enc_ref[...]                                          # (B, S, E2) — DMA'd once, reused

    # encoder projection on the MXU (merge leading dims; S is a sublane multiple here)
    t1 = jnp.dot(enc.reshape(B * S, E2), W_ref[...],
                 preferred_element_type=jnp.float32).reshape(B, S, A)

    # single fused matmul for everything that reads h: [w_hh | U]
    h_proj = jnp.dot(h, whh_U_ref[...],
                     preferred_element_type=jnp.float32)        # (B, 4*HH + A)
    h_gates = h_proj[:, :4 * HH]                                # lane-offset 0
    t2 = h_proj[:, 4 * HH:]                                     # 128-aligned offset

    # tanh(W e_s + U h)
    t3 = jnp.tanh(t1 + t2[:, None, :])                          # (B, S, A)

    # score = v . t3 : VPU multiply + lane reduction (no N=1 MXU matmul)
    score = jnp.sum(t3 * v_ref[...][None, :, :], axis=-1)       # (B, S)

    # softmax over S; reciprocal on the EUP + one Newton step keeps f32 accuracy
    smax = jnp.max(score, axis=-1, keepdims=True)
    ex = jnp.exp(score - smax)
    denom = jnp.sum(ex, axis=-1, keepdims=True)
    inv = pl.reciprocal(denom, approx=True)
    inv = inv * (2.0 - denom * inv)
    attn = ex * inv                                             # (B, S)
    attn_ref[...] = attn

    # context = sum_s attn[b,s] * enc[b,s,:]  (VPU mul + sublane reduce, reuses enc block)
    context = jnp.sum(attn[:, :, None] * enc, axis=1)           # (B, 2E)

    # LSTM single step, PyTorch gate order (i, f, g, o); no lane concat of inputs
    gates = (jnp.dot(emb_ref[...], wih_e_ref[...],
                     preferred_element_type=jnp.float32)
             + jnp.dot(context, wih_c_ref[...],
                       preferred_element_type=jnp.float32)
             + h_gates + b_ref[...])                            # (B, 4*HH)
    i = jax.nn.sigmoid(gates[:, 0 * HH:1 * HH])
    f = jax.nn.sigmoid(gates[:, 1 * HH:2 * HH])
    g = jnp.tanh(gates[:, 2 * HH:3 * HH])
    o = jax.nn.sigmoid(gates[:, 3 * HH:4 * HH])
    c_new = f * c + i * g
    h_new = o * jnp.tanh(c_new)

    cout_ref[...] = c_new
    hout_ref[...] = h_new


# --------------------------------------------------------------------------- #
# Kernel 2: vocab projection, parallel grid over lane-dense vocab tiles
# --------------------------------------------------------------------------- #
def _fc_kernel(h_ref, w_ref, b_ref, out_ref):
    # fc_w streams from HBM in bf16 (bandwidth-bound phase); accumulate in f32.
    out_ref[...] = (jnp.dot(h_ref[...].astype(jnp.bfloat16), w_ref[...],
                            preferred_element_type=jnp.float32)
                    + b_ref[...])


# --------------------------------------------------------------------------- #
# Parameters
# --------------------------------------------------------------------------- #
def make_params(key, hidden_dim, vocab_size, embedding_dim, encoder_hidden_dim):
    """Deterministic synthetic parameters (shapes mirror the PyTorch module)."""
    ks = jax.random.split(key, 10)
    A = hidden_dim                     # attention_size
    E2 = 2 * encoder_hidden_dim        # encoder output feature dim
    HH = 2 * hidden_dim                # LSTM hidden size
    IN = embedding_dim + E2            # LSTM input size
    s = 0.1
    return dict(
        embedding=jax.random.normal(ks[0], (vocab_size, embedding_dim), jnp.float32) * s,
        W=jax.random.normal(ks[1], (E2, A), jnp.float32) * s,          # Linear(2E -> A), no bias
        U=jax.random.normal(ks[2], (HH, A), jnp.float32) * s,          # Linear(2H -> A), no bias
        v=jax.random.normal(ks[3], (A, 1), jnp.float32) * s,           # Linear(A -> 1), no bias
        w_ih=jax.random.normal(ks[4], (IN, 4 * HH), jnp.float32) * s,  # LSTM weight_ih^T
        w_hh=jax.random.normal(ks[5], (HH, 4 * HH), jnp.float32) * s,  # LSTM weight_hh^T
        b=(jax.random.normal(ks[6], (1, 4 * HH), jnp.float32) * s      # b_ih + b_hh
           + jax.random.normal(ks[7], (1, 4 * HH), jnp.float32) * s),
        fc_w=jax.random.normal(ks[8], (HH, vocab_size), jnp.float32) * s,
        fc_b=jax.random.normal(ks[9], (1, vocab_size), jnp.float32) * s,
    )


def _pick_tile_v(V, HH, max_tile=2048, budget_bytes=36 << 20):
    """Largest 256-multiple vocab tile whose double-buffered fc_w/fc_b/logits
    fit a ~36 MiB VMEM budget (safe for v7x's 64 MiB; v5e/v6e have more)."""
    per_col = 2 * (HH * 2 + 4 + 8 * 4)   # 2 buffers: bf16 fc_w col + f32 fc_b + f32 logits (B<=8)
    tile = budget_bytes // per_col
    tile = max(256, min(int(tile), max_tile, _round_up(V, 256)))
    tile = max(256, (tile // 256) * 256)
    return int(tile)


def prepare_params(params, vocab_size, embedding_dim, tile_v=None):
    """One-time parameter fusion / padding (amortized across decode steps).

    - concat [w_hh | U] so the hidden state feeds a single MXU matmul
    - split w_ih into embedding / context halves (kills the lane concat)
    - pad fc_w / fc_b to a 256-aligned tileable vocab dim; store fc_w in bf16
    """
    HH = params["w_hh"].shape[0]
    A = params["U"].shape[1]
    Ed = embedding_dim
    V = vocab_size

    if tile_v is None:
        tile_v = _pick_tile_v(V, HH)
    tile_v = _round_up(tile_v, 256)
    V_pad = _round_up(V, tile_v)

    return dict(
        embedding=params["embedding"],
        W=params["W"],
        whh_U=jnp.concatenate([params["w_hh"], params["U"]], axis=1),   # (HH, 4HH + A)
        v_row=params["v"].reshape(1, A),
        wih_emb=params["w_ih"][:Ed, :],                                 # (Ed, 4HH)
        wih_ctx=params["w_ih"][Ed:, :],                                 # (2E, 4HH)
        b=params["b"],
        fc_w=jnp.pad(params["fc_w"],
                     ((0, 0), (0, V_pad - V))).astype(jnp.bfloat16),    # (HH, V_pad) bf16
        fc_b=jnp.pad(params["fc_b"], ((0, 0), (0, V_pad - V))),         # (1, V_pad) f32
        tile_v=tile_v,
        v_pad=V_pad,
    )


# --------------------------------------------------------------------------- #
# Wrapper: one decode step
# --------------------------------------------------------------------------- #
def decoder_step(input_token, hidden_state, cell_state, encoder_outputs, prepped,
                 hidden_dim, vocab_size, embedding_dim, encoder_hidden_dim):
    """
    input_token:     (B,)   int32
    hidden_state:    (2, B, hidden_dim)
    cell_state:      (2, B, hidden_dim)
    encoder_outputs: (B, S, 2*encoder_hidden_dim)
    Returns (output (B, V), hidden (1, B, 2H), cell (1, B, 2H), attn (B, S)).
    """
    B, S, E2 = encoder_outputs.shape
    A = hidden_dim
    HH = 2 * hidden_dim
    Ed = embedding_dim
    V = vocab_size
    TILE_V = prepped["tile_v"]
    V_pad = prepped["v_pad"]
    NV = V_pad // TILE_V

    # glue: embedding lookup (dropout is identity in eval mode)
    emb = prepped["embedding"][input_token]                                # (B, Ed)
    # glue: same reshape as PyTorch transpose(0,1).reshape(B, -1)
    h_flat = jnp.transpose(hidden_state, (1, 0, 2)).reshape(B, HH)
    c_flat = jnp.transpose(cell_state, (1, 0, 2)).reshape(B, HH)

    def fixed(shape):
        nd = len(shape)
        return pl.BlockSpec(shape, lambda *args, _nd=nd: (0,) * _nd)

    # ----- call 1: attention + LSTM (tiny; everything resident) ----------------
    attn_kernel = functools.partial(_attn_lstm_kernel, B, S, A, HH, E2)

    attn_operand_bytes = 4 * (B * Ed + 2 * B * HH + B * S * E2
                              + E2 * A + HH * (4 * HH + A) + A
                              + (Ed + E2 + 1) * 4 * HH
                              + 2 * B * HH + B * S)
    vmem_attn = int(min(max(2 * attn_operand_bytes + (4 << 20), 16 << 20), 48 << 20))

    attn_flops = 2 * (B * S * E2 * A + B * HH * (4 * HH + A)
                      + B * Ed * 4 * HH + B * E2 * 4 * HH)
    attn_trans = B * S * A + B * S + 5 * B * HH

    h_new, c_new, attn = pl.pallas_call(
        attn_kernel,
        out_shape=(
            jax.ShapeDtypeStruct((B, HH), jnp.float32),
            jax.ShapeDtypeStruct((B, HH), jnp.float32),
            jax.ShapeDtypeStruct((B, S), jnp.float32),
        ),
        grid=(1,),
        in_specs=[
            fixed((B, Ed)),                 # emb
            fixed((B, HH)),                 # h
            fixed((B, HH)),                 # c
            fixed((B, S, E2)),              # encoder_outputs (single 3-D operand)
            fixed((E2, A)),                 # W
            fixed((HH, 4 * HH + A)),        # [w_hh | U]
            fixed((1, A)),                  # v (row)
            fixed((Ed, 4 * HH)),            # w_ih (embedding half)
            fixed((E2, 4 * HH)),            # w_ih (context half)
            fixed((1, 4 * HH)),             # bias
        ],
        out_specs=(fixed((B, HH)), fixed((B, HH)), fixed((B, S))),
        compiler_params=pltpu.CompilerParams(
            dimension_semantics=("arbitrary",),
            vmem_limit_bytes=vmem_attn),
        cost_estimate=pl.CostEstimate(
            flops=int(attn_flops),
            transcendentals=int(attn_trans),
            bytes_accessed=int(attn_operand_bytes)),
    )(emb, h_flat, c_flat, encoder_outputs,
      prepped["W"], prepped["whh_U"], prepped["v_row"],
      prepped["wih_emb"], prepped["wih_ctx"], prepped["b"])

    # ----- call 2: vocab projection, "parallel" over lane-dense vocab tiles ----
    fixed_bytes = 2 * (B * HH * 4)                                     # h_new (buffered)
    tile_bytes = 2 * (HH * TILE_V * 2 + TILE_V * 4 + B * TILE_V * 4)   # 2 pipeline buffers
    vmem_fc = int(min(max(fixed_bytes + tile_bytes + (4 << 20), 16 << 20), 48 << 20))

    fc_flops = 2 * B * HH * V_pad
    fc_bytes = B * HH * 4 + HH * V_pad * 2 + V_pad * 4 + B * V_pad * 4

    out_pad = pl.pallas_call(
        _fc_kernel,
        out_shape=jax.ShapeDtypeStruct((B, V_pad), jnp.float32),
        grid=(NV,),
        in_specs=[
            pl.BlockSpec((B, HH), lambda j: (0, 0)),        # h_new, resident
            pl.BlockSpec((HH, TILE_V), lambda j: (0, j)),   # fc_w vocab tile (bf16)
            pl.BlockSpec((1, TILE_V), lambda j: (0, j)),    # fc_b vocab tile
        ],
        out_specs=pl.BlockSpec((B, TILE_V), lambda j: (0, j)),
        compiler_params=pltpu.CompilerParams(
            # tiles are independent -> megacore sharding on v7x
            dimension_semantics=("parallel",),
            vmem_limit_bytes=vmem_fc),
        cost_estimate=pl.CostEstimate(
            flops=int(fc_flops), transcendentals=0, bytes_accessed=int(fc_bytes)),
    )(h_new, prepped["fc_w"], prepped["fc_b"])

    # PyTorch LSTM returns (num_layers=1, B, 2H); drop vocab padding on the logits.
    return out_pad[:, :V], h_new[None, :, :], c_new[None, :, :], attn


# --------------------------------------------------------------------------- #
# Pure-JAX reference (mirror of the PyTorch forward) for correctness checking
# --------------------------------------------------------------------------- #
def _reference(input_token, hidden_state, cell_state, encoder_outputs, params,
               hidden_dim):
    B, S, E2 = encoder_outputs.shape
    HH = 2 * hidden_dim
    emb = params["embedding"][input_token]
    h = jnp.transpose(hidden_state, (1, 0, 2)).reshape(B, HH)
    c = jnp.transpose(cell_state, (1, 0, 2)).reshape(B, HH)
    t1 = encoder_outputs @ params["W"]
    t2 = h @ params["U"]
    score = (jnp.tanh(t1 + t2[:, None, :]) @ params["v"])[..., 0]
    attn = jax.nn.softmax(score, axis=-1)
    ctx = jnp.einsum("bs,bse->be", attn, encoder_outputs)
    x = jnp.concatenate([emb, ctx], axis=-1)
    gates = x @ params["w_ih"] + h @ params["w_hh"] + params["b"]
    i = jax.nn.sigmoid(gates[:, 0 * HH:1 * HH])
    f = jax.nn.sigmoid(gates[:, 1 * HH:2 * HH])
    g = jnp.tanh(gates[:, 2 * HH:3 * HH])
    o = jax.nn.sigmoid(gates[:, 3 * HH:4 * HH])
    c_new = f * c + i * g
    h_new = o * jnp.tanh(c_new)
    out = h_new @ params["fc_w"] + params["fc_b"]
    return out, h_new[None], c_new[None], attn


if __name__ == "__main__":
    # small shapes consistent with the module; vocab chosen so the vocab grid has >1 tile
    hidden_dim = 32
    vocab_size = 2000
    embedding_dim = 16
    encoder_hidden_dim = 16
    batch = 2
    seq_len = 8

    key = jax.random.PRNGKey(0)
    kp, k1, k2, k3, k4 = jax.random.split(key, 5)
    params = make_params(kp, hidden_dim, vocab_size, embedding_dim, encoder_hidden_dim)
    # TILE_V=1024 -> V_pad=2048, 2 vocab tiles: exercises the parallel grid.
    prepped = prepare_params(params, vocab_size, embedding_dim, tile_v=1024)

    input_token = jax.random.randint(k1, (batch,), 0, vocab_size, dtype=jnp.int32)
    hidden_state = jax.random.normal(k2, (2, batch, hidden_dim), jnp.float32)
    cell_state = jax.random.normal(k3, (2, batch, hidden_dim), jnp.float32)
    encoder_outputs = jax.random.normal(
        k4, (batch, seq_len, 2 * encoder_hidden_dim), jnp.float32)

    out, h_new, c_new, attn = decoder_step(
        input_token, hidden_state, cell_state, encoder_outputs, prepped,
        hidden_dim, vocab_size, embedding_dim, encoder_hidden_dim)
    jax.block_until_ready((out, h_new, c_new, attn))

    ro, rh, rc, ra = _reference(
        input_token, hidden_state, cell_state, encoder_outputs, params, hidden_dim)

    assert out.shape == (batch, vocab_size)
    assert h_new.shape == (1, batch, 2 * hidden_dim)
    assert c_new.shape == (1, batch, 2 * hidden_dim)
    assert attn.shape == (batch, seq_len)

    # state / attention keep full f32 precision
    assert jnp.allclose(h_new, rh, atol=5e-4, rtol=5e-4)
    assert jnp.allclose(c_new, rc, atol=5e-4, rtol=5e-4)
    assert jnp.allclose(attn, ra, atol=5e-4, rtol=5e-4)

    # logits: fc_w (and h inside the dot) are bf16 in the kernel — compare against a
    # reference that uses the same bf16-rounded operands (f32 accumulation).
    fc_w_bf = params["fc_w"].astype(jnp.bfloat16).astype(jnp.float32)
    h_bf = rh[0].astype(jnp.bfloat16).astype(jnp.float32)
    ro_bf = h_bf @ fc_w_bf + params["fc_b"]
    assert jnp.allclose(out, ro_bf, atol=5e-3, rtol=5e-3)
    # loose sanity check against the pure-f32 reference (bf16 weight rounding dominates)
    assert jnp.allclose(out, ro, atol=5e-2, rtol=5e-2)

    print("KERNEL_OK")
</pallas_src>

<mosaic_0001>
module attributes {stable_mosaic.version = 11 : i64} {
  func.func @_attn_lstm_kernel(%arg0: i32, %arg1: memref<2x16xf32, #tpu.memory_space<vmem>>, %arg2: memref<2x64xf32, #tpu.memory_space<vmem>>, %arg3: memref<2x64xf32, #tpu.memory_space<vmem>>, %arg4: memref<2x8x32xf32, #tpu.memory_space<vmem>>, %arg5: memref<32x32xf32, #tpu.memory_space<vmem>>, %arg6: memref<64x288xf32, #tpu.memory_space<vmem>>, %arg7: memref<1x32xf32, #tpu.memory_space<vmem>>, %arg8: memref<16x256xf32, #tpu.memory_space<vmem>>, %arg9: memref<32x256xf32, #tpu.memory_space<vmem>>, %arg10: memref<1x256xf32, #tpu.memory_space<vmem>>, %arg11: memref<2x64xf32, #tpu.memory_space<vmem>>, %arg12: memref<2x64xf32, #tpu.memory_space<vmem>>, %arg13: memref<2x8xf32, #tpu.memory_space<vmem>>) attributes {dimension_semantics = [#tpu.dimension_semantics<arbitrary>], iteration_bounds = array<i64: 1>, scalar_prefetch = 0 : i64, scratch_operands = 0 : i64, tpu.core_type = #tpu.core_type<tc>, window_params = [{pipeline_mode = #tpu.pipeline_mode<synchronous>, transform_indices = @transform_0, window_bounds = array<i64: 2, 16>}, {pipeline_mode = #tpu.pipeline_mode<synchronous>, transform_indices = @transform_1, window_bounds = array<i64: 2, 64>}, {pipeline_mode = #tpu.pipeline_mode<synchronous>, transform_indices = @transform_2, window_bounds = array<i64: 2, 64>}, {pipeline_mode = #tpu.pipeline_mode<synchronous>, transform_indices = @transform_3, window_bounds = array<i64: 2, 8, 32>}, {pipeline_mode = #tpu.pipeline_mode<synchronous>, transform_indices = @transform_4, window_bounds = array<i64: 32, 32>}, {pipeline_mode = #tpu.pipeline_mode<synchronous>, transform_indices = @transform_5, window_bounds = array<i64: 64, 288>}, {pipeline_mode = #tpu.pipeline_mode<synchronous>, transform_indices = @transform_6, window_bounds = array<i64: 1, 32>}, {pipeline_mode = #tpu.pipeline_mode<synchronous>, transform_indices = @transform_7, window_bounds = array<i64: 16, 256>}, {pipeline_mode = #tpu.pipeline_mode<synchronous>, transform_indices = @transform_8, window_bounds = array<i64: 32, 256>}, {pipeline_mode = #tpu.pipeline_mode<synchronous>, transform_indices = @transform_9, window_bounds = array<i64: 1, 256>}, {pipeline_mode = #tpu.pipeline_mode<synchronous>, transform_indices = @transform_10, window_bounds = array<i64: 2, 64>}, {pipeline_mode = #tpu.pipeline_mode<synchronous>, transform_indices = @transform_11, window_bounds = array<i64: 2, 64>}, {pipeline_mode = #tpu.pipeline_mode<synchronous>, transform_indices = @transform_12, window_bounds = array<i64: 2, 8>}]} {
    %c0 = arith.constant 0 : index
    %c0_0 = arith.constant 0 : index
    %0 = vector.load %arg2[%c0, %c0_0] : memref<2x64xf32, #tpu.memory_space<vmem>>, vector<2x64xf32>
    %c0_1 = arith.constant 0 : index
    %c0_2 = arith.constant 0 : index
    %1 = vector.load %arg3[%c0_1, %c0_2] : memref<2x64xf32, #tpu.memory_space<vmem>>, vector<2x64xf32>
    %c0_3 = arith.constant 0 : index
    %c0_4 = arith.constant 0 : index
    %c0_5 = arith.constant 0 : index
    %2 = vector.load %arg4[%c0_3, %c0_4, %c0_5] : memref<2x8x32xf32, #tpu.memory_space<vmem>>, vector<2x8x32xf32>
    %3 = vector.shape_cast %2 : vector<2x8x32xf32> to vector<16x32xf32>
    %c0_6 = arith.constant 0 : index
    %c0_7 = arith.constant 0 : index
    %4 = vector.load %arg5[%c0_6, %c0_7] : memref<32x32xf32, #tpu.memory_space<vmem>>, vector<32x32xf32>
    %cst = arith.constant dense<0.000000e+00> : vector<16x32xf32>
    %5 = tpu.matmul %3, %4, %cst {dimension_numbers = #tpu.dot_dimension_numbers<[1], [0], [0], [1], [0, 0, 1, 1], [], []>} : vector<16x32xf32>, vector<32x32xf32>, vector<16x32xf32> -> vector<16x32xf32>
    %6 = vector.shape_cast %5 : vector<16x32xf32> to vector<2x8x32xf32>
    %c0_8 = arith.constant 0 : index
    %c0_9 = arith.constant 0 : index
    %7 = vector.load %arg6[%c0_8, %c0_9] : memref<64x288xf32, #tpu.memory_space<vmem>>, vector<64x288xf32>
    %cst_10 = arith.constant dense<0.000000e+00> : vector<2x288xf32>
    %8 = tpu.matmul %0, %7, %cst_10 {dimension_numbers = #tpu.dot_dimension_numbers<[1], [0], [0], [1], [0, 0, 1, 1], [], []>} : vector<2x64xf32>, vector<64x288xf32>, vector<2x288xf32> -> vector<2x288xf32>
    %9 = vector.extract_strided_slice %8 {offsets = [0, 0], sizes = [2, 256], strides = [1, 1]} : vector<2x288xf32> to vector<2x256xf32>
    %10 = vector.extract_strided_slice %8 {offsets = [0, 256], sizes = [2, 32], strides = [1, 1]} : vector<2x288xf32> to vector<2x32xf32>
    %11 = vector.shape_cast %10 : vector<2x32xf32> to vector<2x1x32xf32>
    %12 = vector.broadcast %11 : vector<2x1x32xf32> to vector<2x8x32xf32>
    %13 = arith.addf %6, %12 : vector<2x8x32xf32>
    %14 = math.tanh %13 : vector<2x8x32xf32>
    %c0_11 = arith.constant 0 : index
    %c0_12 = arith.constant 0 : index
    %15 = vector.load %arg7[%c0_11, %c0_12] : memref<1x32xf32, #tpu.memory_space<vmem>>, vector<1x32xf32>
    %16 = vector.shape_cast %15 : vector<1x32xf32> to vector<1x1x32xf32>
    %17 = vector.broadcast %16 : vector<1x1x32xf32> to vector<2x8x32xf32>
    %18 = arith.mulf %14, %17 : vector<2x8x32xf32>
    %cst_13 = arith.constant dense<0.000000e+00> : vector<2x8xf32>
    %19 = vector.multi_reduction <add>, %18, %cst_13 [2] : vector<2x8x32xf32> to vector<2x8xf32>
    %cst_14 = arith.constant dense<0xFF800000> : vector<2xf32>
    %20 = vector.multi_reduction <maximumf>, %19, %cst_14 [1] : vector<2x8xf32> to vector<2xf32>
    %21 = vector.shape_cast %20 : vector<2xf32> to vector<2x1xf32>
    %22 = vector.broadcast %21 : vector<2x1xf32> to vector<2x8xf32>
    %23 = arith.subf %19, %22 : vector<2x8xf32>
    %24 = math.exp %23 : vector<2x8xf32>
    %cst_15 = arith.constant dense<0.000000e+00> : vector<2xf32>
    %25 = vector.multi_reduction <add>, %24, %cst_15 [1] : vector<2x8xf32> to vector<2xf32>
    %26 = vector.shape_cast %25 : vector<2xf32> to vector<2x1xf32>
    %27 = tpu.reciprocal %26 {approx = true} : vector<2x1xf32> -> vector<2x1xf32>
    %28 = arith.mulf %26, %27 : vector<2x1xf32>
    %cst_16 = arith.constant 2.000000e+00 : f32
    %29 = vector.broadcast %cst_16 : f32 to vector<2x1xf32>
    %30 = arith.subf %29, %28 : vector<2x1xf32>
    %31 = arith.mulf %27, %30 : vector<2x1xf32>
    %32 = vector.broadcast %31 : vector<2x1xf32> to vector<2x8xf32>
    %33 = arith.mulf %24, %32 : vector<2x8xf32>
    %c0_17 = arith.constant 0 : index
    %c0_18 = arith.constant 0 : index
    %34 = vector.load %arg13[%c0_17, %c0_18] : memref<2x8xf32, #tpu.memory_space<vmem>>, vector<2x8xf32>
    tpu.vector_store %arg13[%c0_17, %c0_18], %33 {strides = array<i32>} : memref<2x8xf32, #tpu.memory_space<vmem>>, vector<2x8xf32>,
    %35 = vector.shape_cast %33 : vector<2x8xf32> to vector<2x8x1xf32>
    %36 = vector.broadcast %35 : vector<2x8x1xf32> to vector<2x8x32xf32>
    %37 = arith.mulf %36, %2 : vector<2x8x32xf32>
    %cst_19 = arith.constant dense<0.000000e+00> : vector<2x32xf32>
    %38 = vector.multi_reduction <add>, %37, %cst_19 [1] : vector<2x8x32xf32> to vector<2x32xf32>
    %c0_20 = arith.constant 0 : index
    %c0_21 = arith.constant 0 : index
    %39 = vector.load %arg1[%c0_20, %c0_21] : memref<2x16xf32, #tpu.memory_space<vmem>>, vector<2x16xf32>
    %c0_22 = arith.constant 0 : index
    %c0_23 = arith.constant 0 : index
    %40 = vector.load %arg8[%c0_22, %c0_23] : memref<16x256xf32, #tpu.memory_space<vmem>>, vector<16x256xf32>
    %cst_24 = arith.constant dense<0.000000e+00> : vector<2x256xf32>
    %41 = tpu.matmul %39, %40, %cst_24 {dimension_numbers = #tpu.dot_dimension_numbers<[1], [0], [0], [1], [0, 0, 1, 1], [], []>} : vector<2x16xf32>, vector<16x256xf32>, vector<2x256xf32> -> vector<2x256xf32>
    %c0_25 = arith.constant 0 : index
    %c0_26 = arith.constant 0 : index
    %42 = vector.load %arg9[%c0_25, %c0_26] : memref<32x256xf32, #tpu.memory_space<vmem>>, vector<32x256xf32>
    %cst_27 = arith.constant dense<0.000000e+00> : vector<2x256xf32>
    %43 = tpu.matmul %38, %42, %cst_27 {dimension_numbers = #tpu.dot_dimension_numbers<[1], [0], [0], [1], [0, 0, 1, 1], [], []>} : vector<2x32xf32>, vector<32x256xf32>, vector<2x256xf32> -> vector<2x256xf32>
    %44 = arith.addf %41, %43 : vector<2x256xf32>
    %45 = arith.addf %44, %9 : vector<2x256xf32>
    %c0_28 = arith.constant 0 : index
    %c0_29 = arith.constant 0 : index
    %46 = vector.load %arg10[%c0_28, %c0_29] : memref<1x256xf32, #tpu.memory_space<vmem>>, vector<1x256xf32>
    %47 = vector.broadcast %46 : vector<1x256xf32> to vector<2x256xf32>
    %48 = arith.addf %45, %47 : vector<2x256xf32>
    %49 = vector.extract_strided_slice %48 {offsets = [0, 0], sizes = [2, 64], strides = [1, 1]} : vector<2x256xf32> to vector<2x64xf32>
    %50 = arith.negf %49 : vector<2x64xf32>
    %51 = math.exp %50 : vector<2x64xf32>
    %cst_30 = arith.constant 1.000000e+00 : f32
    %52 = vector.broadcast %cst_30 : f32 to vector<2x64xf32>
    %53 = arith.addf %52, %51 : vector<2x64xf32>
    %54 = arith.divf %52, %53 : vector<2x64xf32>
    %55 = vector.extract_strided_slice %48 {offsets = [0, 64], sizes = [2, 64], strides = [1, 1]} : vector<2x256xf32> to vector<2x64xf32>
    %56 = arith.negf %55 : vector<2x64xf32>
    %57 = math.exp %56 : vector<2x64xf32>
    %cst_31 = arith.constant 1.000000e+00 : f32
    %58 = vector.broadcast %cst_31 : f32 to vector<2x64xf32>
    %59 = arith.addf %58, %57 : vector<2x64xf32>
    %60 = arith.divf %58, %59 : vector<2x64xf32>
    %61 = vector.extract_strided_slice %48 {offsets = [0, 128], sizes = [2, 64], strides = [1, 1]} : vector<2x256xf32> to vector<2x64xf32>
    %62 = math.tanh %61 : vector<2x64xf32>
    %63 = vector.extract_strided_slice %48 {offsets = [0, 192], sizes = [2, 64], strides = [1, 1]} : vector<2x256xf32> to vector<2x64xf32>
    %64 = arith.negf %63 : vector<2x64xf32>
    %65 = math.exp %64 : vector<2x64xf32>
    %cst_32 = arith.constant 1.000000e+00 : f32
    %66 = vector.broadcast %cst_32 : f32 to vector<2x64xf32>
    %67 = arith.addf %66, %65 : vector<2x64xf32>
    %68 = arith.divf %66, %67 : vector<2x64xf32>
    %69 = arith.mulf %60, %1 : vector<2x64xf32>
    %70 = arith.mulf %54, %62 : vector<2x64xf32>
    %71 = arith.addf %69, %70 : vector<2x64xf32>
    %72 = math.tanh %71 : vector<2x64xf32>
    %73 = arith.mulf %68, %72 : vector<2x64xf32>
    %c0_33 = arith.constant 0 : index
    %c0_34 = arith.constant 0 : index
    %74 = vector.load %arg12[%c0_33, %c0_34] : memref<2x64xf32, #tpu.memory_space<vmem>>, vector<2x64xf32>
    tpu.vector_store %arg12[%c0_33, %c0_34], %71 {strides = array<i32>} : memref<2x64xf32, #tpu.memory_space<vmem>>, vector<2x64xf32>,
    %c0_35 = arith.constant 0 : index
    %c0_36 = arith.constant 0 : index
    %75 = vector.load %arg11[%c0_35, %c0_36] : memref<2x64xf32, #tpu.memory_space<vmem>>, vector<2x64xf32>
    tpu.vector_store %arg11[%c0_35, %c0_36], %73 {strides = array<i32>} : memref<2x64xf32, #tpu.memory_space<vmem>>, vector<2x64xf32>,
    return
  }
  func.func @transform_0(%arg0: i32) -> (i32, i32) {
    %c0_i32 = arith.constant 0 : i32
    %c0_i32_0 = arith.constant 0 : i32
    %c0_i32_1 = arith.constant 0 : i32
    return %c0_i32, %c0_i32_0 : i32, i32
  }
  func.func @transform_1(%arg0: i32) -> (i32, i32) {
    %c0_i32 = arith.constant 0 : i32
    %c0_i32_0 = arith.constant 0 : i32
    %c0_i32_1 = arith.constant 0 : i32
    return %c0_i32, %c0_i32_0 : i32, i32
  }
  func.func @transform_2(%arg0: i32) -> (i32, i32) {
    %c0_i32 = arith.constant 0 : i32
    %c0_i32_0 = arith.constant 0 : i32
    %c0_i32_1 = arith.constant 0 : i32
    return %c0_i32, %c0_i32_0 : i32, i32
  }
  func.func @transform_3(%arg0: i32) -> (i32, i32, i32) {
    %c0_i32 = arith.constant 0 : i32
    %c0_i32_0 = arith.constant 0 : i32
    %c0_i32_1 = arith.constant 0 : i32
    %c0_i32_2 = arith.constant 0 : i32
    return %c0_i32, %c0_i32_0, %c0_i32_1 : i32, i32, i32
  }
  func.func @transform_4(%arg0: i32) -> (i32, i32) {
    %c0_i32 = arith.constant 0 : i32
    %c0_i32_0 = arith.constant 0 : i32
    %c0_i32_1 = arith.constant 0 : i32
    return %c0_i32, %c0_i32_0 : i32, i32
  }
  func.func @transform_5(%arg0: i32) -> (i32, i32) {
    %c0_i32 = arith.constant 0 : i32
    %c0_i32_0 = arith.constant 0 : i32
    %c0_i32_1 = arith.constant 0 : i32
    return %c0_i32, %c0_i32_0 : i32, i32
  }
  func.func @transform_6(%arg0: i32) -> (i32, i32) {
    %c0_i32 = arith.constant 0 : i32
    %c0_i32_0 = arith.constant 0 : i32
    %c0_i32_1 = arith.constant 0 : i32
    return %c0_i32, %c0_i32_0 : i32, i32
  }
  func.func @transform_7(%arg0: i32) -> (i32, i32) {
    %c0_i32 = arith.constant 0 : i32
    %c0_i32_0 = arith.constant 0 : i32
    %c0_i32_1 = arith.constant 0 : i32
    return %c0_i32, %c0_i32_0 : i32, i32
  }
  func.func @transform_8(%arg0: i32) -> (i32, i32) {
    %c0_i32 = arith.constant 0 : i32
    %c0_i32_0 = arith.constant 0 : i32
    %c0_i32_1 = arith.constant 0 : i32
    return %c0_i32, %c0_i32_0 : i32, i32
  }
  func.func @transform_9(%arg0: i32) -> (i32, i32) {
    %c0_i32 = arith.constant 0 : i32
    %c0_i32_0 = arith.constant 0 : i32
    %c0_i32_1 = arith.constant 0 : i32
    return %c0_i32, %c0_i32_0 : i32, i32
  }
  func.func @transform_10(%arg0: i32) -> (i32, i32) {
    %c0_i32 = arith.constant 0 : i32
    %c0_i32_0 = arith.constant 0 : i32
    %c0_i32_1 = arith.constant 0 : i32
    return %c0_i32, %c0_i32_0 : i32, i32
  }
  func.func @transform_11(%arg0: i32) -> (i32, i32) {
    %c0_i32 = arith.constant 0 : i32
    %c0_i32_0 = arith.constant 0 : i32
    %c0_i32_1 = arith.constant 0 : i32
    return %c0_i32, %c0_i32_0 : i32, i32
  }
  func.func @transform_12(%arg0: i32) -> (i32, i32) {
    %c0_i32 = arith.constant 0 : i32
    %c0_i32_0 = arith.constant 0 : i32
    %c0_i32_1 = arith.constant 0 : i32
    return %c0_i32, %c0_i32_0 : i32, i32
  }
}

</mosaic_0001>

<llo_original>
// kernel: tpu_custom_call.1
$region0: #{tpu_custom_call.1}
  #allocation0 [shape = 'u32[]', space=smem, size = 0x4, offset = 0x4, fixed_abs, tag = 'smem constant byte address 0x4 - core index']
  #allocation1 [shape = 'u32[72,128]{1,0:T(1,128)}', space=vmem, size = 0x9000, scoped, tag = 'internal scratch']
  %s0 = inlined_call_operand.hbm [shape: f32[2,16], index: 0, kind: input, shape index: {}]
  %s1 = inlined_call_operand.hbm [shape: f32[2,64], index: 1, kind: input, shape index: {}]
  %s2 = inlined_call_operand.hbm [shape: f32[2,64], index: 2, kind: input, shape index: {}]
  %s3 = inlined_call_operand.hbm [shape: f32[2,8,32], index: 3, kind: input, shape index: {}]
  %s4 = inlined_call_operand.hbm [shape: f32[32,32], index: 4, kind: input, shape index: {}]
  %s5 = inlined_call_operand.hbm [shape: f32[64,288], index: 5, kind: input, shape index: {}]
  %s6 = inlined_call_operand.vmem [shape: f32[1,32], index: 6, kind: input, shape index: {}]
  %s7 = inlined_call_operand.hbm [shape: f32[16,256], index: 7, kind: input, shape index: {}]
  %s8 = inlined_call_operand.hbm [shape: f32[32,256], index: 8, kind: input, shape index: {}]
  %s9 = inlined_call_operand.vmem [shape: f32[1,256], index: 9, kind: input, shape index: {}]
  %s10 = inlined_call_operand.hbm [shape: f32[2,64], index: 10, kind: output, shape index: {0}]
  %s11 = inlined_call_operand.hbm [shape: f32[2,64], index: 11, kind: output, shape index: {1}]
  %s12 = inlined_call_operand.hbm [shape: f32[2,8], index: 12, kind: output, shape index: {2}]
  %13 = xla_tuple %s10, %s11, %s12
  %s14 = sld [smem:[#allocation0]]
  $region98: #{tpu_custom_call.1} parent=0
    _
  %s16 = ssub.s32 1, %s14
  %s17 = scalar_select 0, %s16, %s14
  $region1: #{tpu_custom_call.1} parent=0
    #allocation2 [shape = 'u8[1024]{0}', space=vmem, size = 0x400, scoped, tag = 'input window, operand 0, single buffered']
    #allocation3 [shape = 's32[1]{0}', space=sflag, size = 0x4, scoped, tag = 'scoped memory for tpu_custom_call.1']
    #allocation4 [shape = 's32[1]{0}', space=sflag, size = 0x4, scoped, tag = 'scoped memory for tpu_custom_call.1']
    #allocation5 [shape = 'u8[1024]{0}', space=vmem, size = 0x400, scoped, tag = 'input window, operand 1, single buffered']
    #allocation6 [shape = 's32[1]{0}', space=sflag, size = 0x4, scoped, tag = 'scoped memory for tpu_custom_call.1']
    #allocation7 [shape = 'u8[1024]{0}', space=vmem, size = 0x400, scoped, tag = 'input window, operand 2, single buffered']
    #allocation8 [shape = 'u8[8192]{0}', space=vmem, size = 0x2000, scoped, tag = 'input window, operand 3, single buffered']
    #allocation9 [shape = 's32[1]{0}', space=sflag, size = 0x4, scoped, tag = 'scoped memory for tpu_custom_call.1']
    #allocation10 [shape = 'u8[16384]{0}', space=vmem, size = 0x4000, scoped, tag = 'input window, operand 4, single buffered']
    #allocation11 [shape = 'u8[98304]{0}', space=vmem, size = 0x18000, scoped, tag = 'input window, operand 5, single buffered']
    #allocation12 [shape = 's32[1]{0}', space=sflag, size = 0x4, scoped, tag = 'scoped memory for tpu_custom_call.1']
    #allocation13 [shape = 'u8[16384]{0}', space=vmem, size = 0x4000, scoped, tag = 'input window, operand 7, single buffered']
    #allocation14 [shape = 'u8[32768]{0}', space=vmem, size = 0x8000, scoped, tag = 'input window, operand 8, single buffered']
    #allocation15 [shape = 's32[1]{0}', space=sflag, size = 0x4, scoped, tag = 'scoped memory for tpu_custom_call.1']
    #allocation16 [shape = 'u8[1024]{0}', space=vmem, size = 0x400, scoped, tag = 'output window, operand 0, single buffered']
    #allocation17 [shape = 'u8[1024]{0}', space=vmem, size = 0x400, scoped, tag = 'output window, operand 1, single buffered']
    #allocation18 [shape = 's32[1]{0}', space=sflag, size = 0x4, scoped, tag = 'scoped memory for tpu_custom_call.1']
    #allocation19 [shape = 'u8[1024]{0}', space=vmem, size = 0x400, scoped, tag = 'output window, operand 2, single buffered']
    %18 = vsyncpa [#allocation3], 0
    %19 = vsyncpa [#allocation6], 0
    %20 = vsyncpa [#allocation9], 0
    %21 = vsyncpa [#allocation12], 0
    %22 = vsyncpa [#allocation15], 0
    %23 = vsyncpa [#allocation4], 0
    %24 = vsyncpa [#allocation18], 0
    // Predicated region
    $region2: #{tpu_custom_call.1} parent=1 // pred_check
      _
    $region3: #{tpu_custom_call.1} parent=1 // pred_check_branch
      %26 = sbr.rel (0) target = $region5
    $region4: #{tpu_custom_call.1} parent=1 // pred_region
      %28 = vsyncadd [#allocation3], 0
      %s30 = sshll.u32 %s0, 4
      %s31 = int_to_ptr.hbm [resolvable:$true] %s30
      %s32 = sshll.u32 [#allocation2], 4
      %s33 = int_to_ptr.vmem [resolvable:$true] %s32
      %35 = dma.hbm_to_vmem [thread:$0]  %s31, 32, %s33, [#allocation3]
    $region5: #{tpu_custom_call.1} parent=1 // pred_fallthru
      _
    // Predicated region
    $region6: #{tpu_custom_call.1} parent=1 // pred_check
      _
    $region7: #{tpu_custom_call.1} parent=1 // pred_check_branch
      %37 = sbr.rel (0) target = $region9
    $region8: #{tpu_custom_call.1} parent=1 // pred_region
      %39 = vsyncadd [#allocation6], 0
      %s41 = sshll.u32 %s1, 4
      %s42 = int_to_ptr.hbm [resolvable:$true] %s41
      %s43 = sshll.u32 [#allocation5], 4
      %s44 = int_to_ptr.vmem [resolvable:$true] %s43
      %46 = dma.hbm_to_vmem [thread:$0]  %s42, 32, %s44, [#allocation6]
    $region9: #{tpu_custom_call.1} parent=1 // pred_fallthru
      _
    // Predicated region
    $region10: #{tpu_custom_call.1} parent=1 // pred_check
      _
    $region11: #{tpu_custom_call.1} parent=1 // pred_check_branch
      %48 = sbr.rel (0) target = $region13
    $region12: #{tpu_custom_call.1} parent=1 // pred_region
      %50 = vsyncadd [#allocation6], 0
      %s52 = sshll.u32 %s2, 4
      %s53 = int_to_ptr.hbm [resolvable:$true] %s52
      %s54 = sshll.u32 [#allocation7], 4
      %s55 = int_to_ptr.vmem [resolvable:$true] %s54
      %57 = dma.hbm_to_vmem [thread:$0]  %s53, 32, %s55, [#allocation6]
    $region13: #{tpu_custom_call.1} parent=1 // pred_fallthru
      _
    // Predicated region
    $region14: #{tpu_custom_call.1} parent=1 // pred_check
      _
    $region15: #{tpu_custom_call.1} parent=1 // pred_check_branch
      %59 = sbr.rel (0) target = $region17
    $region16: #{tpu_custom_call.1} parent=1 // pred_region
      %61 = vsyncadd [#allocation9], 0
      %s62 = sshll.u32 %s3, 4
      %s63 = int_to_ptr.hbm [resolvable:$true] %s62
      %s64 = sshll.u32 [#allocation8], 4
      %s65 = int_to_ptr.vmem [resolvable:$true] %s64
      %70 = dma.hbm_to_vmem [thread:$0]  %s63, 256, %s65, [#allocation9], 128, 128, 8
    $region17: #{tpu_custom_call.1} parent=1 // pred_fallthru
      _
    // Predicated region
    $region18: #{tpu_custom_call.1} parent=1 // pred_check
      _
    $region19: #{tpu_custom_call.1} parent=1 // pred_check_branch
      %72 = sbr.rel (0) target = $region21
    $region20: #{tpu_custom_call.1} parent=1 // pred_region
      %74 = vsyncadd [#allocation9], 0
      %s75 = sshll.u32 %s4, 4
      %s76 = int_to_ptr.hbm [resolvable:$true] %s75
      %s77 = sshll.u32 [#allocation10], 4
      %s78 = int_to_ptr.vmem [resolvable:$true] %s77
      %83 = dma.hbm_to_vmem [thread:$0]  %s76, 512, %s78, [#allocation9], 128, 128, 8
    $region21: #{tpu_custom_call.1} parent=1 // pred_fallthru
      _
    // Predicated region
    $region22: #{tpu_custom_call.1} parent=1 // pred_check
      _
    $region23: #{tpu_custom_call.1} parent=1 // pred_check_branch
      %85 = sbr.rel (0) target = $region25
    $region24: #{tpu_custom_call.1} parent=1 // pred_region
      %87 = vsyncadd [#allocation12], 0
      %s88 = sshll.u32 %s5, 4
      %s89 = int_to_ptr.hbm [resolvable:$true] %s88
      %s90 = sshll.u32 [#allocation11], 4
      %s91 = int_to_ptr.vmem [resolvable:$true] %s90
      %96 = dma.hbm_to_vmem [thread:$0]  %s89, 3072, %s91, [#allocation12], 384, 384, 24
    $region25: #{tpu_custom_call.1} parent=1 // pred_fallthru
      _
    // Predicated region
    $region26: #{tpu_custom_call.1} parent=1 // pred_check
      _
    $region27: #{tpu_custom_call.1} parent=1 // pred_check_branch
      %98 = sbr.rel (0) target = $region29
    $region28: #{tpu_custom_call.1} parent=1 // pred_region
      _
    $region29: #{tpu_custom_call.1} parent=1 // pred_fallthru
      _
    // Predicated region
    $region30: #{tpu_custom_call.1} parent=1 // pred_check
      _
    $region31: #{tpu_custom_call.1} parent=1 // pred_check_branch
      %100 = sbr.rel (0) target = $region33
    $region32: #{tpu_custom_call.1} parent=1 // pred_region
      %102 = vsyncadd [#allocation12], 0
      %s103 = sshll.u32 %s7, 4
      %s104 = int_to_ptr.hbm [resolvable:$true] %s103
      %s105 = sshll.u32 [#allocation13], 4
      %s106 = int_to_ptr.vmem [resolvable:$true] %s105
      %111 = dma.hbm_to_vmem [thread:$0]  %s104, 512, %s106, [#allocation12], 256, 256, 16
    $region33: #{tpu_custom_call.1} parent=1 // pred_fallthru
      _
    // Predicated region
    $region34: #{tpu_custom_call.1} parent=1 // pred_check
      _
    $region35: #{tpu_custom_call.1} parent=1 // pred_check_branch
      %113 = sbr.rel (0) target = $region37
    $region36: #{tpu_custom_call.1} parent=1 // pred_region
      %115 = vsyncadd [#allocation15], 0
      %s116 = sshll.u32 %s8, 4
      %s117 = int_to_ptr.hbm [resolvable:$true] %s116
      %s118 = sshll.u32 [#allocation14], 4
      %s119 = int_to_ptr.vmem [resolvable:$true] %s118
      %124 = dma.hbm_to_vmem [thread:$0]  %s117, 1024, %s119, [#allocation15], 256, 256, 16
    $region37: #{tpu_custom_call.1} parent=1 // pred_fallthru
      _
    // Predicated region
    $region38: #{tpu_custom_call.1} parent=1 // pred_check
      _
    $region39: #{tpu_custom_call.1} parent=1 // pred_check_branch
      %126 = sbr.rel (0) target = $region41
    $region40: #{tpu_custom_call.1} parent=1 // pred_region
      _
    $region41: #{tpu_custom_call.1} parent=1 // pred_fallthru
      _
    // Predicated region
    $region42: #{tpu_custom_call.1} parent=1 // pred_check
      _
    $region43: #{tpu_custom_call.1} parent=1 // pred_check_branch
      %128 = sbr.rel (0) target = $region45
    $region44: #{tpu_custom_call.1} parent=1 // pred_region
      %130 = dma.done [#allocation3], 32
    $region45: #{tpu_custom_call.1} parent=1 // pred_fallthru
      _
    // Predicated region
    $region46: #{tpu_custom_call.1} parent=1 // pred_check
      _
    $region47: #{tpu_custom_call.1} parent=1 // pred_check_branch
      %132 = sbr.rel (0) target = $region49
    $region48: #{tpu_custom_call.1} parent=1 // pred_region
      %134 = dma.done [#allocation6], 32
    $region49: #{tpu_custom_call.1} parent=1 // pred_fallthru
      _
    // Predicated region
    $region50: #{tpu_custom_call.1} parent=1 // pred_check
      _
    $region51: #{tpu_custom_call.1} parent=1 // pred_check_branch
      %136 = sbr.rel (0) target = $region53
    $region52: #{tpu_custom_call.1} parent=1 // pred_region
      %138 = dma.done [#allocation6], 32
    $region53: #{tpu_custom_call.1} parent=1 // pred_fallthru
      _
    // Predicated region
    $region54: #{tpu_custom_call.1} parent=1 // pred_check
      _
    $region55: #{tpu_custom_call.1} parent=1 // pred_check_branch
      %140 = sbr.rel (0) target = $region57
    $region56: #{tpu_custom_call.1} parent=1 // pred_region
      %142 = dma.done [#allocation9], 256
    $region57: #{tpu_custom_call.1} parent=1 // pred_fallthru
      _
    // Predicated region
    $region58: #{tpu_custom_call.1} parent=1 // pred_check
      _
    $region59: #{tpu_custom_call.1} parent=1 // pred_check_branch
      %144 = sbr.rel (0) target = $region61
    $region60: #{tpu_custom_call.1} parent=1 // pred_region
      %146 = dma.done [#allocation9], 512
    $region61: #{tpu_custom_call.1} parent=1 // pred_fallthru
      _
    // Predicated region
    $region62: #{tpu_custom_call.1} parent=1 // pred_check
      _
    $region63: #{tpu_custom_call.1} parent=1 // pred_check_branch
      %148 = sbr.rel (0) target = $region65
    $region64: #{tpu_custom_call.1} parent=1 // pred_region
      %150 = dma.done [#allocation12], 3072
    $region65: #{tpu_custom_call.1} parent=1 // pred_fallthru
      _
    // Predicated region
    $region66: #{tpu_custom_call.1} parent=1 // pred_check
      _
    $region67: #{tpu_custom_call.1} parent=1 // pred_check_branch
      %152 = sbr.rel (0) target = $region69
    $region68: #{tpu_custom_call.1} parent=1 // pred_region
      %154 = dma.done [#allocation12], 512
    $region69: #{tpu_custom_call.1} parent=1 // pred_fallthru
      _
    // Predicated region
    $region70: #{tpu_custom_call.1} parent=1 // pred_check
      _
    $region71: #{tpu_custom_call.1} parent=1 // pred_check_branch
      %156 = sbr.rel (0) target = $region73
    $region72: #{tpu_custom_call.1} parent=1 // pred_region
      %158 = dma.done [#allocation15], 1024
    $region73: #{tpu_custom_call.1} parent=1 // pred_fallthru
      _
    %v159 = vld [vmem:[#allocation5] sm:$0x3]
    %v160 = vld [vmem:[#allocation7] sm:$0x3]
    %v161 = vld [vmem:[#allocation8] sm:$0xff]
    %v162 = vld [vmem:[#allocation8 + $0x8] sm:$0xff]
    %v163 = vld [vmem:[#allocation10] sm:$0xff]
    %v164 = vld [vmem:[#allocation10 + $0x8] sm:$0xff]
    %v165 = vld [vmem:[#allocation10 + $0x10] sm:$0xff]
    %v166 = vld [vmem:[#allocation10 + $0x18] sm:$0xff]
    %vm167 = vcmask 261120
    %v169 = vsel %vm167, %v161, 0
    %v172 = vsel %vm167, %v162, 0
    %174 = vmatpush.msra.mxu0 0.0
    %175 = vmatpush.msra.mxu0 0.0
    %176 = vmatpush.msra.mxu0 0.0
    %177 = vmatpush.msra.mxu0 0.0
    %178 = vmatpush.msra.mxu0 0.0
    %179 = vmatpush.msra.mxu0 0.0
    %180 = vmatpush.msra.mxu0 0.0
    %181 = vmatpush.msra.mxu0 0.0
    %182 = vmatpush.msra.mxu0 0.0
    %183 = vmatpush.msra.mxu0 0.0
    %184 = vmatpush.msra.mxu0 0.0
    %185 = vmatpush.msra.mxu0 0.0
    %186 = vmatpush.msra.mxu0 %v166
    %187 = vmatpush.msra.mxu0 %v165
    %188 = vmatpush.msra.mxu0 %v164
    %189 = vmatpush.msra.mxu0 %v163
    %190 = vmatmul.f32.gmra.mxu0 %v169
    %v191 = vpop.f32.mrf.mxu0
    %v192 = vadd.f32 0.0, %v191
    %193 = vmatmul.f32.gmra.mxu0 %v172
    %v194 = vpop.f32.mrf.mxu0
    %v195 = vadd.f32 0.0, %v194
    %196 = vdwg.mxu0
    %v197 = vld [vmem:[#allocation11] sm:$0xff]
    %v198 = vld [vmem:[#allocation11 + $0x8] sm:$0xff]
    %v199 = vld [vmem:[#allocation11 + $0x10] sm:$0xff]
    %v200 = vld [vmem:[#allocation11 + $0x18] sm:$0xff]
    %v201 = vld [vmem:[#allocation11 + $0x20] sm:$0xff]
    %v202 = vld [vmem:[#allocation11 + $0x28] sm:$0xff]
    %v203 = vld [vmem:[#allocation11 + $0x30] sm:$0xff]
    %v204 = vld [vmem:[#allocation11 + $0x38] sm:$0xff]
    %v205 = vld [vmem:[#allocation11 + $0x40] sm:$0xff]
    %v206 = vld [vmem:[#allocation11 + $0x48] sm:$0xff]
    %v207 = vld [vmem:[#allocation11 + $0x50] sm:$0xff]
    %v208 = vld [vmem:[#allocation11 + $0x58] sm:$0xff]
    %v209 = vld [vmem:[#allocation11 + $0x60] sm:$0xff]
    %v210 = vld [vmem:[#allocation11 + $0x68] sm:$0xff]
    %v211 = vld [vmem:[#allocation11 + $0x70] sm:$0xff]
    %v212 = vld [vmem:[#allocation11 + $0x78] sm:$0xff]
    %v213 = vld [vmem:[#allocation11 + $0x80] sm:$0xff]
    %v214 = vld [vmem:[#allocation11 + $0x88] sm:$0xff]
    %v215 = vld [vmem:[#allocation11 + $0x90] sm:$0xff]
    %v216 = vld [vmem:[#allocation11 + $0x98] sm:$0xff]
    %v217 = vld [vmem:[#allocation11 + $0xa0] sm:$0xff]
    %v218 = vld [vmem:[#allocation11 + $0xa8] sm:$0xff]
    %v219 = vld [vmem:[#allocation11 + $0xb0] sm:$0xff]
    %v220 = vld [vmem:[#allocation11 + $0xb8] sm:$0xff]
    %vm221 = vcmask 523264
    %v223 = vsel %vm221, %v159, 0
    %225 = vmatpush.msra.mxu0 0.0
    %226 = vmatpush.msra.mxu0 0.0
    %227 = vmatpush.msra.mxu0 0.0
    %228 = vmatpush.msra.mxu0 0.0
    %229 = vmatpush.msra.mxu0 0.0
    %230 = vmatpush.msra.mxu0 0.0
    %231 = vmatpush.msra.mxu0 0.0
    %232 = vmatpush.msra.mxu0 0.0
    %233 = vmatpush.msra.mxu0 %v218
    %234 = vmatpush.msra.mxu0 %v215
    %235 = vmatpush.msra.mxu0 %v212
    %236 = vmatpush.msra.mxu0 %v209
    %237 = vmatpush.msra.mxu0 %v206
    %238 = vmatpush.msra.mxu0 %v203
    %239 = vmatpush.msra.mxu0 %v200
    %240 = vmatpush.msra.mxu0 %v197
    %241 = vmatmul.f32.gmra.mxu0 %v223
    %v242 = vpop.f32.mrf.mxu0
    %v243 = vadd.f32 0.0, %v242
    %244 = vdwg.mxu0
    %245 = vmatpush.msra.mxu0 0.0
    %246 = vmatpush.msra.mxu0 0.0
    %247 = vmatpush.msra.mxu0 0.0
    %248 = vmatpush.msra.mxu0 0.0
    %249 = vmatpush.msra.mxu0 0.0
    %250 = vmatpush.msra.mxu0 0.0
    %251 = vmatpush.msra.mxu0 0.0
    %252 = vmatpush.msra.mxu0 0.0
    %253 = vmatpush.msra.mxu0 %v219
    %254 = vmatpush.msra.mxu0 %v216
    %255 = vmatpush.msra.mxu0 %v213
    %256 = vmatpush.msra.mxu0 %v210
    %257 = vmatpush.msra.mxu0 %v207
    %258 = vmatpush.msra.mxu0 %v204
    %259 = vmatpush.msra.mxu0 %v201
    %260 = vmatpush.msra.mxu0 %v198
    %261 = vmatmul.f32.gmra.mxu0 %v223
    %v262 = vpop.f32.mrf.mxu0
    %v263 = vadd.f32 0.0, %v262
    %264 = vdwg.mxu0
    %265 = vmatpush.msra.mxu0 0.0
    %266 = vmatpush.msra.mxu0 0.0
    %267 = vmatpush.msra.mxu0 0.0
    %268 = vmatpush.msra.mxu0 0.0
    %269 = vmatpush.msra.mxu0 0.0
    %270 = vmatpush.msra.mxu0 0.0
    %271 = vmatpush.msra.mxu0 0.0
    %272 = vmatpush.msra.mxu0 0.0
    %273 = vmatpush.msra.mxu0 %v220
    %274 = vmatpush.msra.mxu0 %v217
    %275 = vmatpush.msra.mxu0 %v214
    %276 = vmatpush.msra.mxu0 %v211
    %277 = vmatpush.msra.mxu0 %v208
    %278 = vmatpush.msra.mxu0 %v205
    %279 = vmatpush.msra.mxu0 %v202
    %280 = vmatpush.msra.mxu0 %v199
    %281 = vmatmul.f32.gmra.mxu0 %v223
    %v282 = vpop.f32.mrf.mxu0
    %v283 = vadd.f32 0.0, %v282
    %284 = vdwg.mxu0
    %v286 = vrot.slane %v283, 1
    %v287 = vperm.slane %v283, 0
    %v288 = vperm.slane %v286, 0
    %v291 = vadd.f32 %v192, %v287
    %v292 = vadd.f32 %v195, %v288
    %v293 = vtanh.pop %v291
    %v294 = vtanh.pop %v292
    %v295 = vld [vmem:[%s6] sm:$0x1]
    %v297 = vperm.slane %v295, 0
    %v299 = vmul.f32 %v293, %v297
    %v300 = vmul.f32 %v294, %v297
    %v301 = vsel %vm167, %v299, 0.0
    %302 = vadd.xlane.f32.xlu0 %v301
    %v303 = vpop.xlane.xlu0 %302
    %v304 = vsel %vm167, %v300, 0.0
    %305 = vadd.xlane.f32.xlu0 %v304
    %v306 = vpop.xlane.xlu0 %305
    %v309 = vlaneseq
    %v310 = vand.u32 %v309, 127
    %v311 = vperm.slane %v303, %v310
    %v312 = vperm.slane %v306, %v310
    %vm313 = vcmask 1041409
    %v314 = vsel %vm313, %v312, %v311
    %vm316 = vcmask 58368
    %v317 = vsel %vm316, %v314, -inf
    %318 = vmax.xlane.f32.xlu0 %v317
    %v319 = vpop.xlane.xlu0 %318
    %v321 = vperm.slane %v319, 0
    %v322 = vperm.slane %v319, 1
    %v325 = vsub.f32 %v303, %v321
    %v326 = vsub.f32 %v306, %v322
    %v327 = vmul.f32 %v325, 1.442695
    %v328 = vpow.pop %v327
    %v329 = vmul.f32 %v326, 1.442695
    %v330 = vpow.pop %v329
    %333 = vset.pattern.permute.xlu0 0
    %334 = vperm.xlu0 %333, %v328
    %v335 = vpop.permute.xlu0 %334
    %336 = vset.pattern.permute.xlu0 0
    %337 = vperm.xlu0 %336, %v330
    %v338 = vpop.permute.xlu0 %337
    %v339 = vperm.slane %v335, %v310
    %v340 = vperm.slane %v338, %v310
    %v341 = vsel %vm313, %v340, %v339
    %v343 = vsel %vm316, %v341, 0.0
    %344 = vadd.xlane.f32.xlu0 %v343
    %v345 = vpop.xlane.xlu0 %344
    %v346 = vrcp.pop %v345
    %v347 = vmul.f32 %v345, %v346
    %v348 = vsub.f32 2.0, %v347
    %v349 = vmul.f32 %v346, %v348
    %v351 = vperm.slane %v349, 0
    %v352 = vperm.slane %v349, 1
    %v355 = vmul.f32 %v328, %v351
    %v356 = vmul.f32 %v330, %v352
    %359 = vset.pattern.permute.xlu0 0
    %360 = vperm.xlu0 %359, %v355
    %v361 = vpop.permute.xlu0 %360
    %362 = vset.pattern.permute.xlu0 0
    %363 = vperm.xlu0 %362, %v356
    %v364 = vpop.permute.xlu0 %363
    %v365 = vperm.slane %v361, %v310
    %v366 = vperm.slane %v364, %v310
    %v367 = vsel %vm313, %v366, %v365
    %369 = vst.msk [vmem:[#allocation19] sm:$0x3] %vm316, %v367
    %v372 = vmul.f32 %v361, %v161
    %v373 = vmul.f32 %v364, %v162
    %v374 = vsel %vm167, %v372, 0.0
    %v375 = vrot.slane %v374, 4
    %v376 = vadd.f32 %v374, %v375
    %v377 = vrot.slane %v376, 2
    %v378 = vadd.f32 %v376, %v377
    %v379 = vrot.slane %v378, 1
    %v380 = vadd.f32 %v378, %v379
    %v381 = vsel %vm167, %v373, 0.0
    %v382 = vrot.slane %v381, 4
    %v383 = vadd.f32 %v381, %v382
    %v384 = vrot.slane %v383, 2
    %v385 = vadd.f32 %v383, %v384
    %v386 = vrot.slane %v385, 1
    %v387 = vadd.f32 %v385, %v386
    %v388 = vld [vmem:[#allocation2] sm:$0x3]
    %v389 = vld [vmem:[#allocation13] sm:$0xff]
    %v390 = vld [vmem:[#allocation13 + $0x8] sm:$0xff]
    %v391 = vld [vmem:[#allocation13 + $0x10] sm:$0xff]
    %v392 = vld [vmem:[#allocation13 + $0x18] sm:$0xff]
    %v393 = vld [vmem:[#allocation14] sm:$0xff]
    %v394 = vld [vmem:[#allocation14 + $0x8] sm:$0xff]
    %v395 = vld [vmem:[#allocation14 + $0x10] sm:$0xff]
    %v396 = vld [vmem:[#allocation14 + $0x18] sm:$0xff]
    %v397 = vld [vmem:[#allocation14 + $0x20] sm:$0xff]
    %v398 = vld [vmem:[#allocation14 + $0x28] sm:$0xff]
    %v399 = vld [vmem:[#allocation14 + $0x30] sm:$0xff]
    %v400 = vld [vmem:[#allocation14 + $0x38] sm:$0xff]
    %v403 = vsel %vm313, %v387, %v380
    %v404 = vsel %vm167, %v403, 0
    %406 = vmatpush.msra.mxu0 0.0
    %407 = vmatpush.msra.mxu0 0.0
    %408 = vmatpush.msra.mxu0 0.0
    %409 = vmatpush.msra.mxu0 0.0
    %410 = vmatpush.msra.mxu0 0.0
    %411 = vmatpush.msra.mxu0 0.0
    %412 = vmatpush.msra.mxu0 0.0
    %413 = vmatpush.msra.mxu0 0.0
    %414 = vmatpush.msra.mxu0 0.0
    %415 = vmatpush.msra.mxu0 0.0
    %416 = vmatpush.msra.mxu0 0.0
    %417 = vmatpush.msra.mxu0 0.0
    %418 = vmatpush.msra.mxu0 %v399
    %419 = vmatpush.msra.mxu0 %v397
    %420 = vmatpush.msra.mxu0 %v395
    %421 = vmatpush.msra.mxu0 %v393
    %422 = vmatmul.f32.gmra.mxu0 %v404
    %v423 = vpop.f32.mrf.mxu0
    %v424 = vadd.f32 0.0, %v423
    %425 = vdwg.mxu0
    %426 = vmatpush.msra.mxu0 0.0
    %427 = vmatpush.msra.mxu0 0.0
    %428 = vmatpush.msra.mxu0 0.0
    %429 = vmatpush.msra.mxu0 0.0
    %430 = vmatpush.msra.mxu0 0.0
    %431 = vmatpush.msra.mxu0 0.0
    %432 = vmatpush.msra.mxu0 0.0
    %433 = vmatpush.msra.mxu0 0.0
    %434 = vmatpush.msra.mxu0 0.0
    %435 = vmatpush.msra.mxu0 0.0
    %436 = vmatpush.msra.mxu0 0.0
    %437 = vmatpush.msra.mxu0 0.0
    %438 = vmatpush.msra.mxu0 %v400
    %439 = vmatpush.msra.mxu0 %v398
    %440 = vmatpush.msra.mxu0 %v396
    %441 = vmatpush.msra.mxu0 %v394
    %442 = vmatmul.f32.gmra.mxu0 %v404
    %v443 = vpop.f32.mrf.mxu0
    %v444 = vadd.f32 0.0, %v443
    %445 = vdwg.mxu0
    %vm446 = vcmask 130048
    %v448 = vsel %vm446, %v388, 0
    %450 = vmatpush.msra.mxu0 0.0
    %451 = vmatpush.msra.mxu0 0.0
    %452 = vmatpush.msra.mxu0 0.0
    %453 = vmatpush.msra.mxu0 0.0
    %454 = vmatpush.msra.mxu0 0.0
    %455 = vmatpush.msra.mxu0 0.0
    %456 = vmatpush.msra.mxu0 0.0
    %457 = vmatpush.msra.mxu0 0.0
    %458 = vmatpush.msra.mxu0 0.0
    %459 = vmatpush.msra.mxu0 0.0
    %460 = vmatpush.msra.mxu0 0.0
    %461 = vmatpush.msra.mxu0 0.0
    %462 = vmatpush.msra.mxu0 0.0
    %463 = vmatpush.msra.mxu0 0.0
    %464 = vmatpush.msra.mxu0 %v391
    %465 = vmatpush.msra.mxu0 %v389
    %466 = vmatmul.f32.gmra.mxu0 %v448
    %v467 = vpop.f32.mrf.mxu0
    %v468 = vadd.f32 %v424, %v467
    %469 = vdwg.mxu0
    %470 = vmatpush.msra.mxu0 0.0
    %471 = vmatpush.msra.mxu0 0.0
    %472 = vmatpush.msra.mxu0 0.0
    %473 = vmatpush.msra.mxu0 0.0
    %474 = vmatpush.msra.mxu0 0.0
    %475 = vmatpush.msra.mxu0 0.0
    %476 = vmatpush.msra.mxu0 0.0
    %477 = vmatpush.msra.mxu0 0.0
    %478 = vmatpush.msra.mxu0 0.0
    %479 = vmatpush.msra.mxu0 0.0
    %480 = vmatpush.msra.mxu0 0.0
    %481 = vmatpush.msra.mxu0 0.0
    %482 = vmatpush.msra.mxu0 0.0
    %483 = vmatpush.msra.mxu0 0.0
    %484 = vmatpush.msra.mxu0 %v392
    %485 = vmatpush.msra.mxu0 %v390
    %486 = vmatmul.f32.gmra.mxu0 %v448
    %v487 = vpop.f32.mrf.mxu0
    %v488 = vadd.f32 %v444, %v487
    %489 = vdwg.mxu0
    %v490 = vadd.f32 %v468, %v243
    %v491 = vadd.f32 %v488, %v263
    %v492 = vld [vmem:[%s9] sm:$0x3]
    %v494 = vperm.slane %v492, 0
    %v495 = vperm.slane %v492, 1
    %v498 = vadd.f32 %v490, %v494
    %v499 = vadd.f32 %v491, %v495
    %v500 = vxor.u32 %v498, 2147483648
    %v501 = vmul.f32 %v500, 1.442695
    %v502 = vpow.pop %v501
    %v503 = vadd.f32 %v502, 1.0
    %v504 = vrcp.pop %v503
    %v505 = vmul.f32 %v503, %v504
    %v506 = vsub.f32 1.0, %v505
    %v507 = vmul.f32 %v504, %v506
    %v508 = vadd.f32 %v504, %v507
    %vm509 = vweird.f32 %v503
    %vm510 = vweird.f32 %v504
    %vm511 = vmor %vm509, %vm510
    %v512 = vsel %vm511, %v504, %v508
    %v513 = vand.u32 2147483647, %v503
    %vm514 = vcmp.eq.f32.partialorder %v513, 8.507059e+37
    %v515 = vand.u32 %v503, 2147483648
    %v516 = vor.u32 1.1754944e-38, %v515
    %v517 = vsel %vm514, %v516, %v512
    %v518 = vmul.f32 1.0, %v517
    %v519 = vtanh.pop %v499
    %v520 = vxor.u32 %v499, 2147483648
    %v521 = vmul.f32 %v520, 1.442695
    %v522 = vpow.pop %v521
    %v523 = vadd.f32 %v522, 1.0
    %v524 = vrcp.pop %v523
    %v525 = vmul.f32 %v523, %v524
    %v526 = vsub.f32 1.0, %v525
    %v527 = vmul.f32 %v524, %v526
    %v528 = vadd.f32 %v524, %v527
    %vm529 = vweird.f32 %v523
    %vm530 = vweird.f32 %v524
    %vm531 = vmor %vm529, %vm530
    %v532 = vsel %vm531, %v524, %v528
    %v533 = vand.u32 2147483647, %v523
    %vm534 = vcmp.eq.f32.partialorder %v533, 8.507059e+37
    %v535 = vand.u32 %v523, 2147483648
    %v536 = vor.u32 1.1754944e-38, %v535
    %v537 = vsel %vm534, %v536, %v532
    %v538 = vmul.f32 1.0, %v537
    %540 = vrot.lane.b32.xlu0 %v160, 64
    %v541 = vpop.permute.xlu0 %540
    %v543 = vmul.f32 %v518, %v541
    %v544 = vmul.f32 %v518, %v519
    %546 = vrot.lane.b32.xlu0 %v544, 64
    %v547 = vpop.permute.xlu0 %546
    %v549 = vadd.f32 %v543, %v547
    %v550 = vtanh.pop %v549
    %v551 = vmul.f32 %v538, %v550
    %553 = vrot.lane.b32.xlu0 %v549, 64
    %v554 = vpop.permute.xlu0 %553
    %vm556 = vcmask 517120
    %557 = vst.msk [vmem:[#allocation17] sm:$0x3] %vm556, %v554
    %559 = vrot.lane.b32.xlu0 %v551, 64
    %v560 = vpop.permute.xlu0 %559
    %562 = vst.msk [vmem:[#allocation16] sm:$0x3] %vm556, %v560
    // Predicated region
    $region74: #{tpu_custom_call.1} parent=1 // pred_check
      _
    $region75: #{tpu_custom_call.1} parent=1 // pred_check_branch
      %564 = sbr.rel (0) target = $region77
    $region76: #{tpu_custom_call.1} parent=1 // pred_region
      %566 = vsyncadd [#allocation4], 0
      %s568 = sshll.u32 [#allocation16], 4
      %s569 = int_to_ptr.vmem [resolvable:$true] %s568
      %s570 = sshll.u32 %s10, 4
      %s571 = int_to_ptr.hbm [resolvable:$true] %s570
      %573 = dma.vmem_to_hbm [thread:$0]  %s569, 32, %s571, [#allocation4]
    $region77: #{tpu_custom_call.1} parent=1 // pred_fallthru
      _
    // Predicated region
    $region78: #{tpu_custom_call.1} parent=1 // pred_check
      _
    $region79: #{tpu_custom_call.1} parent=1 // pred_check_branch
      %575 = sbr.rel (0) target = $region81
    $region80: #{tpu_custom_call.1} parent=1 // pred_region
      %577 = vsyncadd [#allocation18], 0
      %s579 = sshll.u32 [#allocation17], 4
      %s580 = int_to_ptr.vmem [resolvable:$true] %s579
      %s581 = sshll.u32 %s11, 4
      %s582 = int_to_ptr.hbm [resolvable:$true] %s581
      %584 = dma.vmem_to_hbm [thread:$0]  %s580, 32, %s582, [#allocation18]
    $region81: #{tpu_custom_call.1} parent=1 // pred_fallthru
      _
    // Predicated region
    $region82: #{tpu_custom_call.1} parent=1 // pred_check
      _
    $region83: #{tpu_custom_call.1} parent=1 // pred_check_branch
      %586 = sbr.rel (0) target = $region85
    $region84: #{tpu_custom_call.1} parent=1 // pred_region
      %588 = vsyncadd [#allocation18], 0
      %s590 = sshll.u32 [#allocation19], 4
      %s591 = int_to_ptr.vmem [resolvable:$true] %s590
      %s592 = sshll.u32 %s12, 4
      %s593 = int_to_ptr.hbm [resolvable:$true] %s592
      %595 = dma.vmem_to_hbm [thread:$0]  %s591, 32, %s593, [#allocation18]
    $region85: #{tpu_custom_call.1} parent=1 // pred_fallthru
      _
    // Predicated region
    $region86: #{tpu_custom_call.1} parent=1 // pred_check
      _
    $region87: #{tpu_custom_call.1} parent=1 // pred_check_branch
      %597 = sbr.rel (0) target = $region89
    $region88: #{tpu_custom_call.1} parent=1 // pred_region
      %599 = dma.done [#allocation4], 32
    $region89: #{tpu_custom_call.1} parent=1 // pred_fallthru
      _
    // Predicated region
    $region90: #{tpu_custom_call.1} parent=1 // pred_check
      _
    $region91: #{tpu_custom_call.1} parent=1 // pred_check_branch
      %601 = sbr.rel (0) target = $region93
    $region92: #{tpu_custom_call.1} parent=1 // pred_region
      %603 = dma.done [#allocation18], 32
    $region93: #{tpu_custom_call.1} parent=1 // pred_fallthru
      _
    // Predicated region
    $region94: #{tpu_custom_call.1} parent=1 // pred_check
      _
    $region95: #{tpu_custom_call.1} parent=1 // pred_check_branch
      %605 = sbr.rel (0) target = $region97
    $region96: #{tpu_custom_call.1} parent=1 // pred_region
      %607 = dma.done [#allocation18], 32
    $region97: #{tpu_custom_call.1} parent=1 // pred_fallthru
      _
    %608 = vsyncpa [#allocation3], 1
    %609 = vsyncpa [#allocation6], 1
    %610 = vsyncpa [#allocation9], 1
    %611 = vsyncpa [#allocation12], 1
    %612 = vsyncpa [#allocation15], 1
    %613 = vsyncpa [#allocation4], 1
    %614 = vsyncpa [#allocation18], 1

</llo_original>
